<compile_context>
chip_gen: v7x
topology: tpu7x:2x2x1
jax: 0.10.0
libtpu: 0.0.40
codegen_flags: <defaults>
</compile_context>

<pallas_src>
import functools

import jax
import jax.numpy as jnp
import numpy as np
from jax import lax
from jax.experimental import pallas as pl
from jax.experimental.pallas import tpu as pltpu

HIGHEST = lax.Precision.HIGHEST


def _pick_tile(n, target, multiple):
    """Largest divisor of n that is <= target and a multiple of `multiple`;
    falls back to the full extent n (always layout-legal)."""
    t = min(n, target)
    while t > 0:
        if n % t == 0 and (t % multiple == 0 or t == n):
            return t
        t -= 1
    return n


# --------------------------------------------------------------------------
# Kernels
# --------------------------------------------------------------------------
def _pair_kernel(max_relative_idx,
                 tfi_ref, tfj_ref, rir_ref, ric_ref, wrp_ref, out_ref):
    """One (TI, TJ) tile of the pair embedding for one batch element.

    tfi_ref: (TI, c_z)      tf @ W_i + b_i + b_rp   (precomputed f32)
    tfj_ref: (TJ, c_z)      tf @ W_j + b_j          (precomputed f32)
    rir_ref: (TI, 1) int32  residue_index row tile
    ric_ref: (1, TJ) int32  residue_index col tile
    wrp_ref: (no_bins, c_z) relpos weight (bf16)
    out_ref: (TI, TJ, c_z)
    """
    # Residue indices are integers, so
    #   argmin_k |d - (k - max_rel)| == clip(d, -max_rel, max_rel) + max_rel
    # exactly (no ties possible for integer d and consecutive integer bins).
    d = rir_ref[...] - ric_ref[...]                        # (TI, TJ) int32
    idx = jnp.clip(d, -max_relative_idx, max_relative_idx) + max_relative_idx

    no_bins = wrp_ref.shape[0]
    iota = lax.broadcasted_iota(jnp.int32, (*idx.shape, no_bins), 2)
    one_hot = (iota == idx[..., None]).astype(jnp.bfloat16)   # exact in bf16

    relpos = jnp.einsum("ijk,kc->ijc", one_hot, wrp_ref[...],
                        preferred_element_type=jnp.float32)

    out_ref[...] = (relpos
                    + tfi_ref[...][:, None, :]
                    + tfj_ref[...][None, :, :]).astype(out_ref.dtype)


def _msa_kernel(msa_ref, tfm_ref, wmsa_ref, out_ref):
    """One (TC, TN) tile of the MSA embedding for one batch element.

    msa_ref:  (TC, TN, msa_dim)
    tfm_ref:  (TN, c_m)       tf @ W_m + b_m + b_msa  (precomputed f32)
    wmsa_ref: (msa_dim, c_m)  (bf16)
    out_ref:  (TC, TN, c_m)
    """
    msa = msa_ref[...].astype(jnp.bfloat16)
    e = jnp.einsum("cnd,dm->cnm", msa, wmsa_ref[...],
                   preferred_element_type=jnp.float32)
    out_ref[...] = (e + tfm_ref[...][None, :, :]).astype(out_ref.dtype)


# --------------------------------------------------------------------------
# Wrapper
# --------------------------------------------------------------------------
def input_embedder(tf, ri, msa, params, max_relative_idx, *,
                   out_dtype=None, pair_tile=128,
                   msa_clust_tile=32, msa_res_tile=128):
    B, N, tf_dim = tf.shape
    n_clust, msa_dim = msa.shape[1], msa.shape[-1]
    c_z = params["w_i"].shape[1]
    c_m = params["w_m"].shape[1]
    no_bins = 2 * max_relative_idx + 1
    if out_dtype is None:
        out_dtype = tf.dtype   # downstream trunks taking bf16 can pass bf16 here

    # ---- hoisted small projections; biases folded so each tile does a single
    #      fused add.  These are (B, N, c) — negligible next to the N^2 output.
    tf32 = tf.astype(jnp.float32)
    tf_i = (jnp.dot(tf32, params["w_i"], precision=HIGHEST)
            + params["b_i"] + params["b_rp"])                  # (B, N, c_z)
    tf_j = jnp.dot(tf32, params["w_j"], precision=HIGHEST) + params["b_j"]
    tf_m = (jnp.dot(tf32, params["w_m"], precision=HIGHEST)
            + params["b_m"] + params["b_msa"])                 # (B, N, c_m)

    # Residue index stays integer (fp cast of large indices could round and
    # select the wrong relpos bin).  Both orientations => no in-kernel transpose.
    ri_i32 = ri.astype(jnp.int32)
    ri_row = ri_i32.reshape(B, N, 1)
    ri_col = ri_i32.reshape(B, 1, N)

    w_rp_bf = params["w_rp"].astype(jnp.bfloat16)
    w_msa_bf = params["w_msa"].astype(jnp.bfloat16)

    # ---- tile sizes
    ti = _pick_tile(N, pair_tile, 8)
    tj = _pick_tile(N, pair_tile, 128)        # lane-side tile: prefer 128-multiples
    tc = _pick_tile(n_clust, msa_clust_tile, 1)
    tn = _pick_tile(N, msa_res_tile, 8)

    pair_emb = pl.pallas_call(
        functools.partial(_pair_kernel, max_relative_idx),
        out_shape=jax.ShapeDtypeStruct((B, N, N, c_z), out_dtype),
        grid=(B, N // ti, N // tj),
        in_specs=[
            pl.BlockSpec((None, ti, c_z), lambda b, i, j: (b, i, 0)),
            pl.BlockSpec((None, tj, c_z), lambda b, i, j: (b, j, 0)),
            pl.BlockSpec((None, ti, 1), lambda b, i, j: (b, i, 0)),
            pl.BlockSpec((None, 1, tj), lambda b, i, j: (b, 0, j)),
            pl.BlockSpec((no_bins, c_z), lambda b, i, j: (0, 0)),
        ],
        out_specs=pl.BlockSpec((None, ti, tj, c_z),
                               lambda b, i, j: (b, i, j, 0)),
        compiler_params=pltpu.CompilerParams(
            dimension_semantics=("parallel", "parallel", "parallel")),
    )(tf_i, tf_j, ri_row, ri_col, w_rp_bf)

    msa_emb = pl.pallas_call(
        _msa_kernel,
        out_shape=jax.ShapeDtypeStruct((B, n_clust, N, c_m), out_dtype),
        grid=(B, n_clust // tc, N // tn),
        in_specs=[
            pl.BlockSpec((None, tc, tn, msa_dim), lambda b, c, n: (b, c, n, 0)),
            pl.BlockSpec((None, tn, c_m), lambda b, c, n: (b, n, 0)),
            pl.BlockSpec((msa_dim, c_m), lambda b, c, n: (0, 0)),
        ],
        out_specs=pl.BlockSpec((None, tc, tn, c_m),
                               lambda b, c, n: (b, c, n, 0)),
        compiler_params=pltpu.CompilerParams(
            dimension_semantics=("parallel", "parallel", "parallel")),
    )(msa, tf_m, w_msa_bf)

    return msa_emb, pair_emb


# --------------------------------------------------------------------------
# Pure-JAX reference (mirrors the PyTorch forward, asym_id=None path, f32)
# --------------------------------------------------------------------------
def reference(tf, ri, msa, params, max_relative_idx):
    tf = tf.astype(jnp.float32)
    tf_i = jnp.dot(tf, params["w_i"], precision=HIGHEST) + params["b_i"]
    tf_j = jnp.dot(tf, params["w_j"], precision=HIGHEST) + params["b_j"]

    ri_f = ri.astype(jnp.float32)
    d = ri_f[..., None] - ri_f[..., None, :]
    boundaries = jnp.arange(-max_relative_idx, max_relative_idx + 1,
                            dtype=jnp.float32)
    d3 = jnp.abs(d[..., None] - boundaries)
    idx = jnp.argmin(d3, axis=-1)
    oh = jax.nn.one_hot(idx, boundaries.shape[0], dtype=jnp.float32)
    relpos = jnp.einsum("...k,kc->...c", oh, params["w_rp"],
                        precision=HIGHEST) + params["b_rp"][0]

    pair = relpos + tf_i[..., None, :] + tf_j[..., None, :, :]

    tf_m = jnp.dot(tf, params["w_m"], precision=HIGHEST) + params["b_m"]
    msa_e = (jnp.einsum("...d,dm->...m", msa.astype(jnp.float32),
                        params["w_msa"], precision=HIGHEST)
             + params["b_msa"][0] + tf_m[..., None, :, :])
    return msa_e, pair


# --------------------------------------------------------------------------
if __name__ == "__main__":
    # Small shapes consistent with the module's forward.
    B, N_res, N_clust = 2, 8, 4
    tf_dim, msa_dim = 16, 32
    c_z, c_m = 32, 32
    max_relative_idx = 4          # no_bins = 9
    no_bins = 2 * max_relative_idx + 1

    key = jax.random.PRNGKey(0)
    ks = jax.random.split(key, 12)

    tf = jax.random.normal(ks[0], (B, N_res, tf_dim), jnp.float32)
    ri = jax.random.randint(ks[1], (B, N_res), 0, 20).astype(jnp.int32)
    msa = jax.random.normal(ks[2], (B, N_clust, N_res, msa_dim), jnp.float32)

    def lin(kw, kb, d_in, d_out, scale=0.1):
        return (scale * jax.random.normal(kw, (d_in, d_out), jnp.float32),
                scale * jax.random.normal(kb, (1, d_out), jnp.float32))

    w_i, b_i = lin(ks[3], ks[4], tf_dim, c_z)
    w_j, b_j = lin(ks[5], ks[6], tf_dim, c_z)
    w_rp, b_rp = lin(ks[7], ks[8], no_bins, c_z)
    w_m, b_m = lin(ks[9], ks[10], tf_dim, c_m)
    w_msa, b_msa = lin(ks[11], ks[0], msa_dim, c_m)

    params = dict(w_i=w_i, b_i=b_i, w_j=w_j, b_j=b_j, w_rp=w_rp, b_rp=b_rp,
                  w_m=w_m, b_m=b_m, w_msa=w_msa, b_msa=b_msa)

    msa_emb, pair_emb = input_embedder(tf, ri, msa, params, max_relative_idx)
    jax.block_until_ready((msa_emb, pair_emb))

    msa_ref, pair_ref = reference(tf, ri, msa, params, max_relative_idx)

    assert msa_emb.shape == (B, N_clust, N_res, c_m)
    assert pair_emb.shape == (B, N_res, N_res, c_z)
    # Kernels use bf16 MXU operands with f32 accumulation, so compare against
    # the f32 reference with bf16-appropriate tolerances.
    np.testing.assert_allclose(np.asarray(msa_emb), np.asarray(msa_ref),
                               rtol=2e-2, atol=2e-2)
    np.testing.assert_allclose(np.asarray(pair_emb), np.asarray(pair_ref),
                               rtol=2e-2, atol=2e-2)

    print("KERNEL_OK")
</pallas_src>

<mosaic_0001>
module attributes {stable_mosaic.version = 11 : i64} {
  func.func @_pair_kernel(%arg0: i32, %arg1: i32, %arg2: i32, %arg3: memref<1x8x32xf32, #tpu.memory_space<vmem>>, %arg4: memref<1x8x32xf32, #tpu.memory_space<vmem>>, %arg5: memref<1x8x1xi32, #tpu.memory_space<vmem>>, %arg6: memref<1x1x8xi32, #tpu.memory_space<vmem>>, %arg7: memref<9x32xbf16, #tpu.memory_space<vmem>>, %arg8: memref<1x8x8x32xf32, #tpu.memory_space<vmem>>) attributes {dimension_semantics = [#tpu.dimension_semantics<parallel>, #tpu.dimension_semantics<parallel>, #tpu.dimension_semantics<parallel>], iteration_bounds = array<i64: 2, 1, 1>, scalar_prefetch = 0 : i64, scratch_operands = 0 : i64, tpu.core_type = #tpu.core_type<tc>, window_params = [{transform_indices = @transform_0, window_bounds = array<i64: 1, 8, 32>}, {transform_indices = @transform_1, window_bounds = array<i64: 1, 8, 32>}, {transform_indices = @transform_2, window_bounds = array<i64: 1, 8, 1>}, {transform_indices = @transform_3, window_bounds = array<i64: 1, 1, 8>}, {pipeline_mode = #tpu.pipeline_mode<synchronous>, transform_indices = @transform_4, window_bounds = array<i64: 9, 32>}, {transform_indices = @transform_5, window_bounds = array<i64: 1, 8, 8, 32>}]} {
    %c0 = arith.constant 0 : index
    %c0_0 = arith.constant 0 : index
    %c0_1 = arith.constant 0 : index
    %0 = vector.load %arg5[%c0, %c0_0, %c0_1] : memref<1x8x1xi32, #tpu.memory_space<vmem>>, vector<1x8x1xi32>
    %1 = vector.shape_cast %0 : vector<1x8x1xi32> to vector<8x1xi32>
    %c0_2 = arith.constant 0 : index
    %c0_3 = arith.constant 0 : index
    %c0_4 = arith.constant 0 : index
    %2 = vector.load %arg6[%c0_2, %c0_3, %c0_4] : memref<1x1x8xi32, #tpu.memory_space<vmem>>, vector<1x1x8xi32>
    %3 = vector.shape_cast %2 : vector<1x1x8xi32> to vector<1x8xi32>
    %4 = vector.broadcast %1 : vector<8x1xi32> to vector<8x8xi32>
    %5 = vector.broadcast %3 : vector<1x8xi32> to vector<8x8xi32>
    %6 = arith.subi %4, %5 : vector<8x8xi32>
    %c-4_i32 = arith.constant -4 : i32
    %c4_i32 = arith.constant 4 : i32
    %7 = vector.broadcast %c-4_i32 : i32 to vector<8x8xi32>
    %8 = arith.maxsi %7, %6 : vector<8x8xi32>
    %9 = vector.broadcast %c4_i32 : i32 to vector<8x8xi32>
    %10 = arith.minsi %9, %8 : vector<8x8xi32>
    %c4_i32_5 = arith.constant 4 : i32
    %11 = vector.broadcast %c4_i32_5 : i32 to vector<8x8xi32>
    %12 = arith.addi %10, %11 : vector<8x8xi32>
    %13 = tpu.iota {dimensions = array<i32: 2>} : vector<8x8x9xi32>
    %14 = vector.shape_cast %12 : vector<8x8xi32> to vector<8x8x1xi32>
    %15 = vector.broadcast %14 : vector<8x8x1xi32> to vector<8x8x9xi32>
    %16 = arith.cmpi eq, %13, %15 : vector<8x8x9xi32>
    %17 = arith.extui %16 : vector<8x8x9xi1> to vector<8x8x9xi32>
    %18 = arith.sitofp %17 : vector<8x8x9xi32> to vector<8x8x9xf32>
    %19 = arith.truncf %18 : vector<8x8x9xf32> to vector<8x8x9xbf16>
    %c0_6 = arith.constant 0 : index
    %c0_7 = arith.constant 0 : index
    %20 = vector.load %arg7[%c0_6, %c0_7] : memref<9x32xbf16, #tpu.memory_space<vmem>>, vector<9x32xbf16>
    "tpu.trace_start"() <{level = 10 : i32, message = "ijk,kc->ijc"}> : () -> ()
    %cst = arith.constant dense<0.000000e+00> : vector<8x8x32xf32>
    %21 = tpu.matmul %19, %20, %cst {dimension_numbers = #tpu.dot_dimension_numbers<[2], [0], [0, 1], [1], [0, 0, 0, 1, 1, 1], [], []>} : vector<8x8x9xbf16>, vector<9x32xbf16>, vector<8x8x32xf32> -> vector<8x8x32xf32>
    "tpu.trace_stop"() : () -> ()
    %c0_8 = arith.constant 0 : index
    %c0_9 = arith.constant 0 : index
    %c0_10 = arith.constant 0 : index
    %22 = vector.load %arg3[%c0_8, %c0_9, %c0_10] : memref<1x8x32xf32, #tpu.memory_space<vmem>>, vector<1x8x32xf32>
    %23 = vector.shape_cast %22 : vector<1x8x32xf32> to vector<8x32xf32>
    %24 = vector.shape_cast %23 : vector<8x32xf32> to vector<8x1x32xf32>
    %25 = vector.broadcast %24 : vector<8x1x32xf32> to vector<8x8x32xf32>
    %26 = arith.addf %21, %25 : vector<8x8x32xf32>
    %c0_11 = arith.constant 0 : index
    %c0_12 = arith.constant 0 : index
    %c0_13 = arith.constant 0 : index
    %27 = vector.load %arg4[%c0_11, %c0_12, %c0_13] : memref<1x8x32xf32, #tpu.memory_space<vmem>>, vector<1x8x32xf32>
    %28 = vector.shape_cast %27 : vector<1x8x32xf32> to vector<8x32xf32>
    %29 = vector.shape_cast %28 : vector<8x32xf32> to vector<1x8x32xf32>
    %30 = vector.broadcast %29 : vector<1x8x32xf32> to vector<8x8x32xf32>
    %31 = arith.addf %26, %30 : vector<8x8x32xf32>
    %c0_14 = arith.constant 0 : index
    %c0_15 = arith.constant 0 : index
    %c0_16 = arith.constant 0 : index
    %c0_17 = arith.constant 0 : index
    %32 = vector.load %arg8[%c0_14, %c0_15, %c0_16, %c0_17] : memref<1x8x8x32xf32, #tpu.memory_space<vmem>>, vector<1x8x8x32xf32>
    %33 = vector.shape_cast %32 : vector<1x8x8x32xf32> to vector<8x8x32xf32>
    %34 = vector.shape_cast %31 : vector<8x8x32xf32> to vector<1x8x8x32xf32>
    tpu.vector_store %arg8[%c0_14, %c0_15, %c0_16, %c0_17], %34 {strides = array<i32>} : memref<1x8x8x32xf32, #tpu.memory_space<vmem>>, vector<1x8x8x32xf32>,
    return
  }
  func.func @transform_0(%arg0: i32, %arg1: i32, %arg2: i32) -> (i32, i32, i32) {
    %c0_i32 = arith.constant 0 : i32
    %c0_i32_0 = arith.constant 0 : i32
    return %arg0, %arg1, %c0_i32 : i32, i32, i32
  }
  func.func @transform_1(%arg0: i32, %arg1: i32, %arg2: i32) -> (i32, i32, i32) {
    %c0_i32 = arith.constant 0 : i32
    %c0_i32_0 = arith.constant 0 : i32
    return %arg0, %arg2, %c0_i32 : i32, i32, i32
  }
  func.func @transform_2(%arg0: i32, %arg1: i32, %arg2: i32) -> (i32, i32, i32) {
    %c0_i32 = arith.constant 0 : i32
    %c0_i32_0 = arith.constant 0 : i32
    return %arg0, %arg1, %c0_i32 : i32, i32, i32
  }
  func.func @transform_3(%arg0: i32, %arg1: i32, %arg2: i32) -> (i32, i32, i32) {
    %c0_i32 = arith.constant 0 : i32
    %c0_i32_0 = arith.constant 0 : i32
    return %arg0, %c0_i32, %arg2 : i32, i32, i32
  }
  func.func @transform_4(%arg0: i32, %arg1: i32, %arg2: i32) -> (i32, i32) {
    %c0_i32 = arith.constant 0 : i32
    %c0_i32_0 = arith.constant 0 : i32
    %c0_i32_1 = arith.constant 0 : i32
    return %c0_i32, %c0_i32_0 : i32, i32
  }
  func.func @transform_5(%arg0: i32, %arg1: i32, %arg2: i32) -> (i32, i32, i32, i32) {
    %c0_i32 = arith.constant 0 : i32
    %c0_i32_0 = arith.constant 0 : i32
    return %arg0, %arg1, %arg2, %c0_i32 : i32, i32, i32, i32
  }
}

</mosaic_0001>

<llo_original>
// kernel: tpu_custom_call.1
$region0: #{tpu_custom_call.1}
  #allocation0 [shape = 'u32[]', space=smem, size = 0x4, offset = 0x4, fixed_abs, tag = 'smem constant byte address 0x4 - core index']
  #allocation1 [shape = 'u32[144,128]{1,0:T(1,128)}', space=vmem, size = 0x12000, scoped, tag = 'internal scratch']
  %s0 = inlined_call_operand.vmem [shape: f32[2,8,32], index: 0, kind: input, shape index: {}]
  %s1 = inlined_call_operand.hbm [shape: f32[2,8,32], index: 1, kind: input, shape index: {}]
  %s2 = inlined_call_operand.vmem [shape: s32[2,8,1], index: 2, kind: input, shape index: {}]
  %s3 = inlined_call_operand.vmem [shape: s32[2,1,8], index: 3, kind: input, shape index: {}]
  %s4 = inlined_call_operand.vmem [shape: bf16[9,32], index: 4, kind: input, shape index: {}]
  %s5 = inlined_call_operand.hbm [shape: f32[2,8,8,32], index: 5, kind: output, shape index: {}]
  %s6 = sld [smem:[#allocation0]]
  $region57: #{tpu_custom_call.1} parent=0
    _
  %s8 = ssub.s32 1, %s6
  %s9 = scalar_select 0, %s8, %s6
  $region1: #{tpu_custom_call.1} parent=0
    #allocation2 [shape = 'u8[8192]{0}', space=vmem, size = 0x2000, scoped, tag = 'input window, operand 1']
    #allocation3 [shape = 's32[2]{0}', space=sflag, size = 0x8, scoped, tag = 'scoped memory for tpu_custom_call.1']
    #allocation4 [shape = 's32[2]{0}', space=sflag, size = 0x8, scoped, tag = 'scoped memory for tpu_custom_call.1']
    #allocation5 [shape = 'u8[65536]{0}', space=vmem, size = 0x10000, scoped, tag = 'output window, operand 0']
    %10 = vsyncpa [#allocation3], 0
    %s11 = scalar_lea.sflag [#allocation3], 1
    %12 = vsyncpa %s11, 0
    %13 = vsyncpa [#allocation4], 0
    %s14 = scalar_lea.sflag [#allocation4], 1
    %15 = vsyncpa %s14, 0
    loop: start=0, step=1, limit=4
    $region2: #{tpu_custom_call.1} parent=1 // loop_pre_header
      _
    $region3: #{tpu_custom_call.1} parent=1 // loop_header
      %s17 = sphi 0, %s21
      %p18 = scmp.ge.s32.totalorder %s17, 4
      %s24 = sphi 0, %s43
      %s25 = sphi 0, %s39
      %s26 = sphi 0, %s35
      %s27 = sphi 0, %s24
      %s28 = sphi 0, %s25
      %s29 = sphi 0, %s26
      %s30 = sphi 0, %s27
      %s31 = sphi 0, %s28
      %s32 = sphi 0, %s29
      %s48 = sphi 0, %s50
      %s51 = sphi 0, %s48
      %s52 = sphi 0, %s51
      %s68 = sphi 0, %s52
      %s76 = sphi 0, %s78
      %s79 = sphi 0, %s76
      %s80 = sphi 0, %s79
      %s96 = sphi 0, %s80
      %s104 = sphi 0, %s106
      %s107 = sphi 0, %s104
      %s108 = sphi 0, %s107
      %s124 = sphi 0, %s108
      %s132 = sphi 0, %s134
      %s135 = sphi 0, %s132
      %s136 = sphi 0, %s135
      %s152 = sphi 0, %s136
      %s156 = sphi 0, %s156
      %s158 = sphi 0, %s156
      %s159 = sphi 0, %s158
      %s173 = sphi 0, %s159
      %s183 = sphi 0, %s185
      %s186 = sphi 0, %s183
      %s187 = sphi 0, %s186
      %s203 = sphi 0, %s187
    $region4: #{tpu_custom_call.1} parent=1 // loop_header_branch
      %20 = sbr.rel (%p18) target = $region8
    $region5: #{tpu_custom_call.1} parent=1 // loop_body
      %s22 = ssub.s32 %s17, 1
      %s23 = ssub.s32 %s17, 2
      %s33 = sadd.s32 1, %s26
      %p34 = scmp.ge.s32.totalorder %s33, 1
      %s35 = scalar_select %p34, 0, %s33
      %s36 = sadd.s32 1, %s25
      %s37 = scalar_select %p34, %s36, %s25
      %p38 = scmp.ge.s32.totalorder %s37, 1
      %s39 = scalar_select %p38, 0, %s37
      %s40 = sadd.s32 1, %s24
      %s41 = scalar_select %p38, %s40, %s24
      %p42 = scmp.ge.s32.totalorder %s41, 2
      %s43 = scalar_select %p42, 0, %s41
      %s44 = ssub.s32 %s24, %s43
      %s45 = ssub.s32 %s25, %s39
      %s46 = sor.u32 %s44, %s45
      %p47 = scmp.eq.s32.totalorder %s46, 0
      %s49 = sadd.s32 %s48, 1
      %s50 = scalar_select %p47, %s48, %s49
      %p53 = pneg %p47
      %p54 = scmp.eq.s32.totalorder %s17, 1
      %p55 = por %p53, %p54
      %p56 = scmp.ne.s32.totalorder %s48, %s51
      %p57 = scmp.eq.s32.totalorder %s17, 0
      %p58 = por %p56, %p57
      %p59 = scmp.ne.s32.totalorder %s48, %s51
      %p60 = scmp.eq.s32.totalorder %s22, 1
      %p61 = por %p59, %p60
      %p62 = scmp.ne.s32.totalorder %s51, %s52
      %p63 = scmp.eq.s32.totalorder %s22, 0
      %p64 = por %p62, %p63
      %p65 = scmp.ne.s32.totalorder %s51, %s52
      %p66 = scmp.eq.s32.totalorder %s23, 1
      %p67 = por %p65, %p66
      %p69 = scmp.ne.s32.totalorder %s52, %s68
      %p70 = scmp.eq.s32.totalorder %s23, 0
      %p71 = por %p69, %p70
      %s72 = ssub.s32 %s24, %s43
      %s73 = ssub.s32 %s26, %s35
      %s74 = sor.u32 %s72, %s73
      %p75 = scmp.eq.s32.totalorder %s74, 0
      %s77 = sadd.s32 %s76, 1
      %s78 = scalar_select %p75, %s76, %s77
      %p81 = pneg %p75
      %p82 = scmp.eq.s32.totalorder %s17, 1
      %p83 = por %p81, %p82
      %p84 = scmp.ne.s32.totalorder %s76, %s79
      %p85 = scmp.eq.s32.totalorder %s17, 0
      %p86 = por %p84, %p85
      %p87 = scmp.ne.s32.totalorder %s76, %s79
      %p88 = scmp.eq.s32.totalorder %s22, 1
      %p89 = por %p87, %p88
      %p90 = scmp.ne.s32.totalorder %s79, %s80
      %p91 = scmp.eq.s32.totalorder %s22, 0
      %p92 = por %p90, %p91
      %p93 = scmp.ne.s32.totalorder %s79, %s80
      %p94 = scmp.eq.s32.totalorder %s23, 1
      %p95 = por %p93, %p94
      %p97 = scmp.ne.s32.totalorder %s80, %s96
      %p98 = scmp.eq.s32.totalorder %s23, 0
      %p99 = por %p97, %p98
      %s100 = ssub.s32 %s24, %s43
      %s101 = ssub.s32 %s25, %s39
      %s102 = sor.u32 %s100, %s101
      %p103 = scmp.eq.s32.totalorder %s102, 0
      %s105 = sadd.s32 %s104, 1
      %s106 = scalar_select %p103, %s104, %s105
      %p109 = pneg %p103
      %p110 = scmp.eq.s32.totalorder %s17, 1
      %p111 = por %p109, %p110
      %p112 = scmp.ne.s32.totalorder %s104, %s107
      %p113 = scmp.eq.s32.totalorder %s17, 0
      %p114 = por %p112, %p113
      %p115 = scmp.ne.s32.totalorder %s104, %s107
      %p116 = scmp.eq.s32.totalorder %s22, 1
      %p117 = por %p115, %p116
      %p118 = scmp.ne.s32.totalorder %s107, %s108
      %p119 = scmp.eq.s32.totalorder %s22, 0
      %p120 = por %p118, %p119
      %p121 = scmp.ne.s32.totalorder %s107, %s108
      %p122 = scmp.eq.s32.totalorder %s23, 1
      %p123 = por %p121, %p122
      %p125 = scmp.ne.s32.totalorder %s108, %s124
      %p126 = scmp.eq.s32.totalorder %s23, 0
      %p127 = por %p125, %p126
      %s128 = ssub.s32 %s24, %s43
      %s129 = ssub.s32 %s26, %s35
      %s130 = sor.u32 %s128, %s129
      %p131 = scmp.eq.s32.totalorder %s130, 0
      %s133 = sadd.s32 %s132, 1
      %s134 = scalar_select %p131, %s132, %s133
      %p137 = pneg %p131
      %p138 = scmp.eq.s32.totalorder %s17, 1
      %p139 = por %p137, %p138
      %p140 = scmp.ne.s32.totalorder %s132, %s135
      %p141 = scmp.eq.s32.totalorder %s17, 0
      %p142 = por %p140, %p141
      %p143 = scmp.ne.s32.totalorder %s132, %s135
      %p144 = scmp.eq.s32.totalorder %s22, 1
      %p145 = por %p143, %p144
      %p146 = scmp.ne.s32.totalorder %s135, %s136
      %p147 = scmp.eq.s32.totalorder %s22, 0
      %p148 = por %p146, %p147
      %p149 = scmp.ne.s32.totalorder %s135, %s136
      %p150 = scmp.eq.s32.totalorder %s23, 1
      %p151 = por %p149, %p150
      %p153 = scmp.ne.s32.totalorder %s136, %s152
      %p154 = scmp.eq.s32.totalorder %s23, 0
      %p155 = por %p153, %p154
      %s157 = sadd.s32 %s156, 1
      %p160 = scmp.eq.s32.totalorder %s17, 1
      %p161 = scmp.ne.s32.totalorder %s156, %s158
      %p162 = scmp.eq.s32.totalorder %s17, 0
      %p163 = por %p161, %p162
      %p164 = scmp.ne.s32.totalorder %s156, %s158
      %p165 = scmp.eq.s32.totalorder %s22, 1
      %p166 = por %p164, %p165
      %p167 = scmp.ne.s32.totalorder %s158, %s159
      %p168 = scmp.eq.s32.totalorder %s22, 0
      %p169 = por %p167, %p168
      %p170 = scmp.ne.s32.totalorder %s158, %s159
      %p171 = scmp.eq.s32.totalorder %s23, 1
      %p172 = por %p170, %p171
      %p174 = scmp.ne.s32.totalorder %s159, %s173
      %p175 = scmp.eq.s32.totalorder %s23, 0
      %p176 = por %p174, %p175
      %s177 = ssub.s32 %s24, %s43
      %s178 = ssub.s32 %s25, %s39
      %s179 = sor.u32 %s177, %s178
      %s180 = ssub.s32 %s26, %s35
      %s181 = sor.u32 %s179, %s180
      %p182 = scmp.eq.s32.totalorder %s181, 0
      %s184 = sadd.s32 %s183, 1
      %s185 = scalar_select %p182, %s183, %s184
      %p188 = pneg %p182
      %p189 = scmp.eq.s32.totalorder %s17, 1
      %p190 = por %p188, %p189
      %p191 = scmp.ne.s32.totalorder %s183, %s186
      %p192 = scmp.eq.s32.totalorder %s17, 0
      %p193 = por %p191, %p192
      %p194 = scmp.ne.s32.totalorder %s183, %s186
      %p195 = scmp.eq.s32.totalorder %s22, 1
      %p196 = por %p194, %p195
      %p197 = scmp.ne.s32.totalorder %s186, %s187
      %p198 = scmp.eq.s32.totalorder %s22, 0
      %p199 = por %p197, %p198
      %p200 = scmp.ne.s32.totalorder %s186, %s187
      %p201 = scmp.eq.s32.totalorder %s23, 1
      %p202 = por %p200, %p201
      %p204 = scmp.ne.s32.totalorder %s187, %s203
      %p205 = scmp.eq.s32.totalorder %s23, 0
      %p206 = por %p204, %p205
      %p207 = scmp.le.s32.totalorder 1, %s17
      %p208 = scmp.lt.s32.totalorder %s17, 3
      %p209 = pnand %p207, %p208
      %p210 = pneg %p209
      // Predicated region
      $region9: #{tpu_custom_call.1} parent=5 // pred_check
        _
      $region10: #{tpu_custom_call.1} parent=5 // pred_check_branch
        %212 = sbr.rel (%p209) target = $region12
      $region11: #{tpu_custom_call.1} parent=5 // pred_region
        %s213 = ssub.s32 %s17, 1
        // Predicated region
        $region13: #{tpu_custom_call.1} parent=11 // pred_check
          %p214 = pneg %p169
        $region14: #{tpu_custom_call.1} parent=11 // pred_check_branch
          %216 = sbr.rel (%p214) target = $region16
        $region15: #{tpu_custom_call.1} parent=11 // pred_region
          _
        $region16: #{tpu_custom_call.1} parent=11 // pred_fallthru
          _
      $region12: #{tpu_custom_call.1} parent=5 // pred_fallthru
        _
      %p217 = scmp.lt.s32.totalorder %s17, 2
      // Predicated region
      $region17: #{tpu_custom_call.1} parent=5 // pred_check
        %p218 = pneg %p217
      $region18: #{tpu_custom_call.1} parent=5 // pred_check_branch
        %220 = sbr.rel (%p218) target = $region20
      $region19: #{tpu_custom_call.1} parent=5 // pred_region
        // Predicated region
        $region21: #{tpu_custom_call.1} parent=19 // pred_check
          %p221 = pneg %p58
        $region22: #{tpu_custom_call.1} parent=19 // pred_check_branch
          %223 = sbr.rel (%p221) target = $region24
        $region23: #{tpu_custom_call.1} parent=19 // pred_region
          %p224 = scmp.lt.s32.totalorder %s24, 1
          %s225 = scalar_select %p224, %s24, 1
          %p226 = scmp.lt.s32.totalorder %s25, 0
          %s227 = scalar_select %p226, %s25, 0
          %s228 = sadd.s32 %s227, %s225
          %s229 = smul.addr %s228, 8
          %s230 = scalar_lea.vmem %s0, %s229
        $region24: #{tpu_custom_call.1} parent=19 // pred_fallthru
          _
        // Predicated region
        $region25: #{tpu_custom_call.1} parent=19 // pred_check
          %p231 = pneg %p86
        $region26: #{tpu_custom_call.1} parent=19 // pred_check_branch
          %233 = sbr.rel (%p231) target = $region28
        $region27: #{tpu_custom_call.1} parent=19 // pred_region
          %s234 = sand.u32 %s76, 1
          %s235 = scalar_lea.sflag [#allocation3], %s234
          %s236 = sand.u32 %s76, 1
          %s237 = smul.addr %s236, 8
          %s238 = scalar_lea.vmem [#allocation2], %s237
          %s240 = ssub.s32 128, 128
          %241 = vsyncadd %s235, %s240
          %s242 = sadd.s32 %s26, %s24
          %s243 = smul.addr %s242, 128
          %s244 = scalar_lea.hbm %s1, %s243
          %s246 = sshll.u32 %s238, 4
          %s247 = int_to_ptr.vmem [resolvable:$true] %s246
          %249 = dma.hbm_to_vmem [thread:$0]  %s244, 128, %s247, %s235
        $region28: #{tpu_custom_call.1} parent=19 // pred_fallthru
          _
        // Predicated region
        $region29: #{tpu_custom_call.1} parent=19 // pred_check
          %p250 = pneg %p114
        $region30: #{tpu_custom_call.1} parent=19 // pred_check_branch
          %252 = sbr.rel (%p250) target = $region32
        $region31: #{tpu_custom_call.1} parent=19 // pred_region
          %p253 = scmp.lt.s32.totalorder %s24, 1
          %s254 = scalar_select %p253, %s24, 1
          %p255 = scmp.lt.s32.totalorder %s25, 0
          %s256 = scalar_select %p255, %s25, 0
          %s257 = sadd.s32 %s256, %s254
          %s258 = smul.addr %s257, 8
          %s259 = scalar_lea.vmem %s2, %s258
        $region32: #{tpu_custom_call.1} parent=19 // pred_fallthru
          _
        // Predicated region
        $region33: #{tpu_custom_call.1} parent=19 // pred_check
          %p260 = pneg %p142
        $region34: #{tpu_custom_call.1} parent=19 // pred_check_branch
          %262 = sbr.rel (%p260) target = $region36
        $region35: #{tpu_custom_call.1} parent=19 // pred_region
          %p263 = scmp.lt.s32.totalorder %s24, 1
          %s264 = scalar_select %p263, %s24, 1
          %p265 = scmp.lt.s32.totalorder %s26, 0
          %s266 = scalar_select %p265, %s26, 0
          %s267 = sadd.s32 %s266, %s264
          %s268 = scalar_lea.vmem %s3, %s267
        $region36: #{tpu_custom_call.1} parent=19 // pred_fallthru
          _
      $region20: #{tpu_custom_call.1} parent=5 // pred_fallthru
        _
      %p269 = scmp.le.s32.totalorder 1, %s17
      %p270 = scmp.lt.s32.totalorder %s17, 3
      %p271 = pnand %p269, %p270
      %p272 = pneg %p271
      // Predicated region
      $region37: #{tpu_custom_call.1} parent=5 // pred_check
        _
      $region38: #{tpu_custom_call.1} parent=5 // pred_check_branch
        %274 = sbr.rel (%p271) target = $region40
      $region39: #{tpu_custom_call.1} parent=5 // pred_region
        %s275 = ssub.s32 %s17, 1
        %s276 = sand.u32 %s79, 1
        %s277 = scalar_lea.sflag [#allocation3], %s276
        %s278 = sand.u32 %s79, 1
        %s279 = smul.addr %s278, 8
        %s280 = scalar_lea.vmem [#allocation2], %s279
        // Predicated region
        $region41: #{tpu_custom_call.1} parent=39 // pred_check
          %p281 = pneg %p92
        $region42: #{tpu_custom_call.1} parent=39 // pred_check_branch
          %283 = sbr.rel (%p281) target = $region44
        $region43: #{tpu_custom_call.1} parent=39 // pred_region
          %284 = dma.done %s277, 128
        $region44: #{tpu_custom_call.1} parent=39 // pred_fallthru
          _
        %p285 = scmp.lt.s32.totalorder %s27, 1
        %s286 = scalar_select %p285, %s27, 1
        %p287 = scmp.lt.s32.totalorder %s28, 0
        %s288 = scalar_select %p287, %s28, 0
        %s289 = sadd.s32 %s288, %s286
        %s290 = smul.addr %s289, 8
        %s291 = scalar_lea.vmem %s0, %s290
        %p292 = pneg %p64
        %p293 = pneg %p61
        %s294 = sand.u32 %s79, 1
        %s295 = scalar_lea.sflag [#allocation3], %s294
        %s296 = sand.u32 %s79, 1
        %s297 = smul.addr %s296, 8
        %s298 = scalar_lea.vmem [#allocation2], %s297
        %p299 = pneg %p92
        %p300 = pneg %p89
        %p301 = scmp.lt.s32.totalorder %s27, 1
        %s302 = scalar_select %p301, %s27, 1
        %p303 = scmp.lt.s32.totalorder %s28, 0
        %s304 = scalar_select %p303, %s28, 0
        %s305 = sadd.s32 %s304, %s302
        %s306 = smul.addr %s305, 8
        %s307 = scalar_lea.vmem %s2, %s306
        %p308 = pneg %p120
        %p309 = pneg %p117
        %p310 = scmp.lt.s32.totalorder %s27, 1
        %s311 = scalar_select %p310, %s27, 1
        %p312 = scmp.lt.s32.totalorder %s29, 0
        %s313 = scalar_select %p312, %s29, 0
        %s314 = sadd.s32 %s313, %s311
        %s315 = scalar_lea.vmem %s3, %s314
        %p316 = pneg %p148
        %p317 = pneg %p145
        %p318 = pneg %p169
        %p319 = pneg %p166
        %p320 = pneg %p199
        %p321 = pneg %p196
        %s322 = sand.u32 %s186, 1
        %s323 = scalar_lea.sflag [#allocation4], %s322
        %s324 = sand.u32 %s186, 1
        %s325 = smul.addr %s324, 64
        %s326 = scalar_lea.vmem [#allocation5], %s325
        %p327 = scmp.lt.s32.totalorder %s27, 1
        %s328 = scalar_select %p327, %s27, 1
        %p329 = scmp.lt.s32.totalorder %s28, 0
        %s330 = scalar_select %p329, %s28, 0
        %s331 = sadd.s32 %s330, %s328
        %s332 = smul.addr %s331, 8
        %s333 = scalar_lea.vmem %s0, %s332
        %p334 = scmp.lt.s32.totalorder %s27, 1
        %s335 = scalar_select %p334, %s27, 1
        %p336 = scmp.lt.s32.totalorder %s28, 0
        %s337 = scalar_select %p336, %s28, 0
        %s338 = sadd.s32 %s337, %s335
        %s339 = smul.addr %s338, 8
        %s340 = scalar_lea.vmem %s2, %s339
        %p341 = scmp.lt.s32.totalorder %s27, 1
        %s342 = scalar_select %p341, %s27, 1
        %p343 = scmp.lt.s32.totalorder %s29, 0
        %s344 = scalar_select %p343, %s29, 0
        %s345 = sadd.s32 %s344, %s342
        %s346 = scalar_lea.vmem %s3, %s345
        %s347 = smul.u32 8, %s28
        %v349 = vld [vmem:[%s340] sm:$0xff]
        %v350 = vld [vmem:[%s346] sm:$0x1]
        %351 = vset.pattern.permute.xlu0 0
        %352 = vperm.xlu0 %351, %v349
        %v353 = vpop.permute.xlu0 %352
        %v354 = vlaneseq
        %v355 = vshrl.u32 %v354, 7
        %v356 = vsub.s32 0, %v355
        %v357 = vrot.slane %v350, %v356
        %v358 = vsub.s32 %v353, %v357
        %vm359 = vcmp.gt.s32.totalorder %v358, 4294967292
        %v360 = vsel %vm359, %v358, 4294967292
        %vm361 = vcmp.lt.s32.totalorder %v360, 4
        %v362 = vsel %vm361, %v360, 4
        %v363 = vadd.s32 %v362, 4
        %v364 = vlaneseq
        %v365 = vand.u32 %v364, 127
        %v366 = vlaneseq
        %v367 = vshrl.u32 %v366, 7
        %v368 = vsub.s32 0, %v367
        %v369 = vrot.slane %v363, %v368
        %371 = vbcast.lane.b32.xlu0 %v369, 256
        %v372 = vpop.permute.xlu0 %371
        %v373 = vlaneseq
        %v374 = vshrl.u32 %v373, 7
        %v375 = vsub.s32 1, %v374
        %v376 = vrot.slane %v363, %v375
        %378 = vbcast.lane.b32.xlu0 %v376, 256
        %v379 = vpop.permute.xlu0 %378
        %v380 = vlaneseq
        %v381 = vshrl.u32 %v380, 7
        %v382 = vsub.s32 2, %v381
        %v383 = vrot.slane %v363, %v382
        %385 = vbcast.lane.b32.xlu0 %v383, 256
        %v386 = vpop.permute.xlu0 %385
        %v387 = vlaneseq
        %v388 = vshrl.u32 %v387, 7
        %v389 = vsub.s32 3, %v388
        %v390 = vrot.slane %v363, %v389
        %392 = vbcast.lane.b32.xlu0 %v390, 256
        %v393 = vpop.permute.xlu0 %392
        %v394 = vlaneseq
        %v395 = vshrl.u32 %v394, 7
        %v396 = vsub.s32 4, %v395
        %v397 = vrot.slane %v363, %v396
        %399 = vbcast.lane.b32.xlu0 %v397, 256
        %v400 = vpop.permute.xlu0 %399
        %v401 = vlaneseq
        %v402 = vshrl.u32 %v401, 7
        %v403 = vsub.s32 5, %v402
        %v404 = vrot.slane %v363, %v403
        %406 = vbcast.lane.b32.xlu0 %v404, 256
        %v407 = vpop.permute.xlu0 %406
        %v408 = vlaneseq
        %v409 = vshrl.u32 %v408, 7
        %v410 = vsub.s32 6, %v409
        %v411 = vrot.slane %v363, %v410
        %413 = vbcast.lane.b32.xlu0 %v411, 256
        %v414 = vpop.permute.xlu0 %413
        %v415 = vlaneseq
        %v416 = vshrl.u32 %v415, 7
        %v417 = vsub.s32 7, %v416
        %v418 = vrot.slane %v363, %v417
        %420 = vbcast.lane.b32.xlu0 %v418, 256
        %v421 = vpop.permute.xlu0 %420
        %vm422 = vcmp.eq.s32.totalorder %v365, %v372
        %vm423 = vcmp.eq.s32.totalorder %v365, %v379
        %vm424 = vcmp.eq.s32.totalorder %v365, %v386
        %vm425 = vcmp.eq.s32.totalorder %v365, %v393
        %vm426 = vcmp.eq.s32.totalorder %v365, %v400
        %vm427 = vcmp.eq.s32.totalorder %v365, %v407
        %vm428 = vcmp.eq.s32.totalorder %v365, %v414
        %vm429 = vcmp.eq.s32.totalorder %v365, %v421
        %v430 = vsel %vm422, 1, 0
        %v431 = vsel %vm423, 1, 0
        %v432 = vsel %vm424, 1, 0
        %v433 = vsel %vm425, 1, 0
        %v434 = vsel %vm426, 1, 0
        %v435 = vsel %vm427, 1, 0
        %v436 = vsel %vm428, 1, 0
        %v437 = vsel %vm429, 1, 0
        %v438 = vcvt.s32.f32 %v430
        %v439 = vcvt.s32.f32 %v431
        %v440 = vcvt.s32.f32 %v432
        %v441 = vcvt.s32.f32 %v433
        %v442 = vcvt.s32.f32 %v434
        %v443 = vcvt.s32.f32 %v435
        %v444 = vcvt.s32.f32 %v436
        %v445 = vcvt.s32.f32 %v437
        %v446 = vpack.c.bf16 %v438, %v438
        %v447 = vpack.c.bf16 %v439, %v439
        %v448 = vpack.c.bf16 %v440, %v440
        %v449 = vpack.c.bf16 %v441, %v441
        %v450 = vpack.c.bf16 %v442, %v442
        %v451 = vpack.c.bf16 %v443, %v443
        %v452 = vpack.c.bf16 %v444, %v444
        %v453 = vpack.c.bf16 %v445, %v445
        %v454 = vld [vmem:[%s4] sm:$0xf]
        %v455 = vld [vmem:[%s4 + $0x4] sm:$0x1]
        %v456 = vld [vmem:[%s333] sm:$0xff]
        %v458 = vcombine.high %v456, %v456
        %v460 = vunpack.c.l.s4 1966171168
        %v461 = vunpack.c.0.s8 %v460
        %v462 = vlaneseq
        %v463 = vshrl.u32 %v462, 7
        %v464 = vsub.s32 %v461, %v463
        %v465 = vrot.slane %v456, %v464
        %v467 = vunpack.c.l.s4 1966171168
        %v468 = vunpack.c.0.s8 %v467
        %v469 = vlaneseq
        %v470 = vshrl.u32 %v469, 7
        %v471 = vsub.s32 %v468, %v470
        %v472 = vrot.slane %v458, %v471
        %v473 = vcombine.high %v465, %v465
        %v474 = vcombine.high %v472, %v472
        %v476 = vunpack.c.l.s4 1966171168
        %v477 = vunpack.c.0.s8 %v476
        %v478 = vlaneseq
        %v479 = vshrl.u32 %v478, 7
        %v480 = vsub.s32 %v477, %v479
        %v481 = vrot.slane %v465, %v480
        %v483 = vunpack.c.l.s4 1966171168
        %v484 = vunpack.c.0.s8 %v483
        %v485 = vlaneseq
        %v486 = vshrl.u32 %v485, 7
        %v487 = vsub.s32 %v484, %v486
        %v488 = vrot.slane %v472, %v487
        %v490 = vunpack.c.l.s4 1966171168
        %v491 = vunpack.c.0.s8 %v490
        %v492 = vlaneseq
        %v493 = vshrl.u32 %v492, 7
        %v494 = vsub.s32 %v491, %v493
        %v495 = vrot.slane %v473, %v494
        %v497 = vunpack.c.l.s4 1966171168
        %v498 = vunpack.c.0.s8 %v497
        %v499 = vlaneseq
        %v500 = vshrl.u32 %v499, 7
        %v501 = vsub.s32 %v498, %v500
        %v502 = vrot.slane %v474, %v501
        %v503 = vcombine.high %v481, %v481
        %v504 = vcombine.high %v488, %v488
        %v505 = vcombine.high %v495, %v495
        %v506 = vcombine.high %v502, %v502
        %v507 = vlaneseq
        %v508 = vshrl.u32 %v507, 7
        %v509 = vsub.s32 0, %v508
        %v510 = vrot.slane %v481, %v509
        %v511 = vlaneseq
        %v512 = vshrl.u32 %v511, 7
        %v513 = vsub.s32 0, %v512
        %v514 = vrot.slane %v495, %v513
        %v515 = vlaneseq
        %v516 = vshrl.u32 %v515, 7
        %v517 = vsub.s32 0, %v516
        %v518 = vrot.slane %v503, %v517
        %v519 = vlaneseq
        %v520 = vshrl.u32 %v519, 7
        %v521 = vsub.s32 0, %v520
        %v522 = vrot.slane %v505, %v521
        %v523 = vlaneseq
        %v524 = vshrl.u32 %v523, 7
        %v525 = vsub.s32 0, %v524
        %v526 = vrot.slane %v488, %v525
        %v527 = vlaneseq
        %v528 = vshrl.u32 %v527, 7
        %v529 = vsub.s32 0, %v528
        %v530 = vrot.slane %v502, %v529
        %v531 = vlaneseq
        %v532 = vshrl.u32 %v531, 7
        %v533 = vsub.s32 0, %v532
        %v534 = vrot.slane %v504, %v533
        %v535 = vlaneseq
        %v536 = vshrl.u32 %v535, 7
        %v537 = vsub.s32 0, %v536
        %v538 = vrot.slane %v506, %v537
        %v555 = vunpack.c.l.b16 %v446
        %v556 = vunpack.c.l.b16 %v447
        %v557 = vunpack.c.l.b16 %v448
        %v558 = vunpack.c.l.b16 %v449
        %v559 = vunpack.c.l.b16 %v450
        %v560 = vunpack.c.l.b16 %v451
        %v561 = vunpack.c.l.b16 %v452
        %v562 = vunpack.c.l.b16 %v453
        %v563 = vpack.c.b16 %v556, %v555
        %v564 = vpack.c.b16 %v558, %v557
        %v565 = vpack.c.b16 %v560, %v559
        %v566 = vpack.c.b16 %v562, %v561
        %v569 = vunpack.c.l.b16 %v454
        %v570 = vunpack.c.l.b16 %v455
        %v571 = vpack.c.b16 %v570, %v569
        %vm572 = vcmask 72704
        %v574 = vsel %vm572, %v563, 0
        %v577 = vsel %vm572, %v564, 0
        %v580 = vsel %vm572, %v565, 0
        %v583 = vsel %vm572, %v566, 0
        %vm585 = vcmask 1043456
        %vm586 = vcmask 1044480
        %v587 = vsel %vm585, 4294967295, 65535
        %v588 = vsel %vm586, %v587, 0
        %v590 = vand.u32 %v571, %v588
        %592 = vmatprep.subr.bf16.mxu0 0
        %593 = vmatpush1.bf16.msra.mxu0 %v590
        %594 = vmatprep.subr.bf16.mxu0 0
        %595 = vmatpush1.bf16.msra.mxu0 0
        %596 = vmatprep.subr.bf16.mxu0 0
        %597 = vmatpush1.bf16.msra.mxu0 0
        %598 = vmatprep.subr.bf16.mxu0 0
        %599 = vmatpush1.bf16.msra.mxu0 0
        %600 = vmatprep.subr.bf16.mxu0 0
        %601 = vmatpush1.bf16.msra.mxu0 0
        %602 = vmatprep.subr.bf16.mxu0 0
        %603 = vmatpush1.bf16.msra.mxu0 0
        %604 = vmatprep.subr.bf16.mxu0 0
        %605 = vmatpush1.bf16.msra.mxu0 0
        %606 = vmatprep.subr.bf16.mxu0 0
        %607 = vmatpush1.bf16.msra.mxu0 0
        %608 = vmatprep.subr.bf16.mxu0 0
        %609 = vmatpush1.bf16.msra.mxu0 0
        %610 = vmatprep.subr.bf16.mxu0 0
        %611 = vmatpush1.bf16.msra.mxu0 0
        %612 = vmatprep.subr.bf16.mxu0 0
        %613 = vmatpush1.bf16.msra.mxu0 0
        %614 = vmatprep.subr.bf16.mxu0 0
        %615 = vmatpush1.bf16.msra.mxu0 0
        %616 = vmatprep.subr.bf16.mxu0 0
        %617 = vmatpush1.bf16.msra.mxu0 0
        %618 = vmatprep.subr.bf16.mxu0 0
        %619 = vmatpush1.bf16.msra.mxu0 0
        %620 = vmatprep.subr.bf16.mxu0 0
        %621 = vmatpush1.bf16.msra.mxu0 0
        %622 = vmatprep.subr.bf16.mxu0 0
        %623 = vmatpush1.bf16.msra.mxu0 0
        %624 = vmatprep.mubr.bf16.mxu0 0
        %625 = vmatmul.mubr.bf16.gmra.mrb[0].mxu0 %v574
        %v626 = vpop.f32.mrb[0].mxu0
        %v627 = vadd.f32 %v510, %v626
        %v628 = vpop.f32.mrb[0].mxu0
        %v629 = vpop.f32.mrb[0].mxu0
        %v630 = vadd.f32 %v514, %v629
        %v631 = vpop.f32.mrb[0].mxu0
        %632 = vmatprep.mubr.bf16.mxu0 0
        %633 = vmatmul.mubr.bf16.gmra.mrb[0].mxu0 %v577
        %v634 = vpop.f32.mrb[0].mxu0
        %v635 = vadd.f32 %v518, %v634
        %v636 = vpop.f32.mrb[0].mxu0
        %v637 = vpop.f32.mrb[0].mxu0
        %v638 = vadd.f32 %v522, %v637
        %v639 = vpop.f32.mrb[0].mxu0
        %640 = vmatprep.mubr.bf16.mxu0 0
        %641 = vmatmul.mubr.bf16.gmra.mrb[0].mxu0 %v580
        %v642 = vpop.f32.mrb[0].mxu0
        %v643 = vadd.f32 %v526, %v642
        %v644 = vpop.f32.mrb[0].mxu0
        %v645 = vpop.f32.mrb[0].mxu0
        %v646 = vadd.f32 %v530, %v645
        %v647 = vpop.f32.mrb[0].mxu0
        %648 = vmatprep.mubr.bf16.mxu0 0
        %649 = vmatmul.mubr.bf16.gmra.mrb[0].mxu0 %v583
        %v650 = vpop.f32.mrb[0].mxu0
        %v651 = vadd.f32 %v534, %v650
        %v652 = vpop.f32.mrb[0].mxu0
        %v653 = vpop.f32.mrb[0].mxu0
        %v654 = vadd.f32 %v538, %v653
        %v655 = vpop.f32.mrb[0].mxu0
        %656 = vdwg.mxu0
        %v657 = vld [vmem:[%s280] sm:$0xff]
        %v658 = vadd.f32 %v627, %v657
        %v659 = vadd.f32 %v630, %v657
        %v660 = vadd.f32 %v635, %v657
        %v661 = vadd.f32 %v638, %v657
        %v662 = vadd.f32 %v643, %v657
        %v663 = vadd.f32 %v646, %v657
        %v664 = vadd.f32 %v651, %v657
        %v665 = vadd.f32 %v654, %v657
        %vm666 = vcmask 261120
        %667 = vst.msk [vmem:[%s326] sm:$0xff] %vm666, %v658
        %668 = vst.msk [vmem:[%s326 + $0x8] sm:$0xff] %vm666, %v659
        %669 = vst.msk [vmem:[%s326 + $0x10] sm:$0xff] %vm666, %v660
        %670 = vst.msk [vmem:[%s326 + $0x18] sm:$0xff] %vm666, %v661
        %671 = vst.msk [vmem:[%s326 + $0x20] sm:$0xff] %vm666, %v662
        %672 = vst.msk [vmem:[%s326 + $0x28] sm:$0xff] %vm666, %v663
        %673 = vst.msk [vmem:[%s326 + $0x30] sm:$0xff] %vm666, %v664
        %674 = vst.msk [vmem:[%s326 + $0x38] sm:$0xff] %vm666, %v665
        %s675 = sand.u32 %s186, 1
        %s676 = scalar_lea.sflag [#allocation4], %s675
        %s677 = sand.u32 %s186, 1
        %s678 = smul.addr %s677, 64
        %s679 = scalar_lea.vmem [#allocation5], %s678
        // Predicated region
        $region45: #{tpu_custom_call.1} parent=39 // pred_check
          %p680 = pneg %p196
        $region46: #{tpu_custom_call.1} parent=39 // pred_check_branch
          %682 = sbr.rel (%p680) target = $region48
        $region47: #{tpu_custom_call.1} parent=39 // pred_region
          %s683 = smul.u32 8, %s28
          %s685 = ssub.s32 1024, 1024
          %686 = vsyncadd %s676, %s685
          %s687 = sadd.s32 %s29, %s683
          %s688 = smul.addr %s27, 8
          %s689 = sadd.s32 %s687, %s688
          %s690 = smul.addr %s689, 128
          %s691 = scalar_lea.hbm %s5, %s690
          %s692 = sshll.u32 %s679, 4
          %s693 = int_to_ptr.vmem [resolvable:$true] %s692
          %698 = dma.vmem_to_hbm [thread:$0]  %s693, 1024, %s691, %s676, 128, 128, 8
        $region48: #{tpu_custom_call.1} parent=39 // pred_fallthru
          _
      $region40: #{tpu_custom_call.1} parent=5 // pred_fallthru
        _
      %p699 = scmp.le.s32.totalorder 2, %s17
      // Predicated region
      $region49: #{tpu_custom_call.1} parent=5 // pred_check
        %p700 = pneg %p699
      $region50: #{tpu_custom_call.1} parent=5 // pred_check_branch
        %702 = sbr.rel (%p700) target = $region52
      $region51: #{tpu_custom_call.1} parent=5 // pred_region
        %s703 = ssub.s32 %s17, 2
        // Predicated region
        $region53: #{tpu_custom_call.1} parent=51 // pred_check
          %p704 = pneg %p202
        $region54: #{tpu_custom_call.1} parent=51 // pred_check_branch
          %706 = sbr.rel (%p704) target = $region56
        $region55: #{tpu_custom_call.1} parent=51 // pred_region
          %s707 = sand.u32 %s187, 1
          %s708 = scalar_lea.sflag [#allocation4], %s707
          %s709 = sand.u32 %s187, 1
          %s710 = smul.addr %s709, 64
          %s711 = scalar_lea.vmem [#allocation5], %s710
          %712 = dma.done %s708, 1024
        $region56: #{tpu_custom_call.1} parent=51 // pred_fallthru
          _
      $region52: #{tpu_custom_call.1} parent=5 // pred_fallthru
        _
    $region6: #{tpu_custom_call.1} parent=1 // loop_footer
      %s21 = sadd.s32 1, %s17
    $region7: #{tpu_custom_call.1} parent=1 // loop_footer_branch
      %16 = sbr.rel target = $region3
    $region8: #{tpu_custom_call.1} parent=1 // loop_exit
      _
    %713 = vsyncpa [#allocation3], 1
    %s714 = scalar_lea.sflag [#allocation3], 1
    %715 = vsyncpa %s714, 1
    %716 = vsyncpa [#allocation4], 1
    %s717 = scalar_lea.sflag [#allocation4], 1
    %718 = vsyncpa %s717, 1

</llo_original>
